<compile_context>
chip_gen: v7x
topology: tpu7x:2x2x1
jax: 0.10.0
libtpu: 0.0.40
codegen_flags: <defaults>
</compile_context>

<pallas_src>
import functools

import jax
import jax.numpy as jnp
from jax.experimental import pallas as pl
from jax.experimental.pallas import tpu as pltpu

_OUT_LANES = 128                       # lane-dense output slab width
_NEG_BIG = -1e30                       # "minus infinity" without inf-inf hazards
_VMEM_BUDGET = 40 * 1024 * 1024        # resident budget; leaves headroom under v7x's 64 MiB
_OLD_BUF_TARGET = 8 * 1024 * 1024      # per-buffer target for streamed `old` blocks


def similarity_kernel(old_ref, nm_ref, w5t_ref, b5_ref, b1_ref, b2_ref, out_ref,
                      m_sc, l_sc, acc_sc, *, t_total):
    """Grid = (batch tiles [parallel], T tiles [arbitrary])."""
    ti = pl.program_id(1)
    nt = pl.num_programs(1)
    TT, TB, D = old_ref.shape

    @pl.when(ti == 0)
    def _init():
        m_sc[...] = jnp.full_like(m_sc, _NEG_BIG)
        l_sc[...] = jnp.zeros_like(l_sc)
        acc_sc[...] = jnp.zeros_like(acc_sc)

    old = old_ref[...]                      # (TT, TB, D), native dtype
    b5 = b5_ref[0]                          # SMEM scalar

    # ---- fc5 logits for this T-slice: (TT*TB, D) @ (D, 1) on the MXU ----
    # N=1 dot is pure filler while the kernel is HBM-bound on streaming `old`.
    # TB is a multiple of 8, so the reshape only merges dims above the lane axis.
    of = old.reshape(TT * TB, D)
    lg = jnp.dot(of, w5t_ref[...], preferred_element_type=jnp.float32)   # (TT*TB, 1)
    logits = lg.reshape(TT, TB, 1) + b5                                  # f32

    if t_total % TT != 0:   # static check: padded T rows exist -> mask them out
        t_idx = ti * TT + jax.lax.broadcasted_iota(jnp.int32, (TT, TB, 1), 0)
        logits = jnp.where(t_idx < t_total, logits, _NEG_BIG)

    # ---- online softmax over T + weighted accumulation of `old` (VPU) ----
    m_prev = m_sc[...]                                          # (TB, 1)
    m_new = jnp.maximum(m_prev, jnp.max(logits, axis=0))        # (TB, 1)
    alpha = jnp.exp(m_prev - m_new)                             # (TB, 1)
    p = jnp.exp(logits - m_new)                                 # (TT, TB, 1) f32
    l_sc[...] = alpha * l_sc[...] + jnp.sum(p, axis=0)
    if old.dtype == jnp.float32:
        weighted = p * old
    else:
        # keep the largest multiply in the native low-precision dtype (bf16 VALU on
        # v6e/v7x), accumulate into the f32 scratch.
        weighted = (p.astype(old.dtype) * old).astype(jnp.float32)
    acc_sc[...] = alpha * acc_sc[...] + jnp.sum(weighted, axis=0)
    m_sc[...] = m_new

    @pl.when(ti == nt - 1)
    def _finalize():
        pooled = acc_sc[...] * pl.reciprocal(l_sc[...], approx=False)   # (TB, D)
        nm = nm_ref[...]                         # (TB, 2D) f32 = new @ [M1 | M2] (hoisted)
        s_pos = jnp.sum(nm[:, :D] * pooled, axis=-1, keepdims=True) + b1_ref[0]
        s_neg = jnp.sum(nm[:, D:] * pooled, axis=-1, keepdims=True) + b2_ref[0]
        # 2-way softmax
        mx = jnp.maximum(s_pos, s_neg)
        e_pos = jnp.exp(s_pos - mx)
        e_neg = jnp.exp(s_neg - mx)
        inv = pl.reciprocal(e_pos + e_neg, approx=False)
        p_pos = e_pos * inv                                             # (TB, 1)
        p_neg = e_neg * inv
        # lane-dense output slab: col 0 = pos, col 1 = neg, rest zero
        col = jax.lax.broadcasted_iota(jnp.int32, (TB, _OUT_LANES), 1)
        out_ref[...] = jnp.where(col == 0, p_pos,
                                 jnp.where(col == 1, p_neg, 0.0))


def _round_up(x, m):
    return ((x + m - 1) // m) * m


def similarity_forward(old_tbd, new, w5, b5, M1, M2, b1, b2,
                       *, block_b=None, block_t=None):
    """old_tbd: (T, B, D), new: (B, D). Returns (B, 2) softmax scores."""
    T, B, D = old_tbd.shape
    assert new.shape == (B, D)
    itemsize = jnp.dtype(old_tbd.dtype).itemsize

    # ---- batch tile ----
    if block_b is None:
        TB = min(256, _round_up(B, 8))
        # v7x megacore: keep >= 2 tiles on the parallel batch axis when possible so
        # the second TensorCore (and its share of HBM bandwidth) is not idle.
        if TB > 8 and _round_up(B, TB) // TB < 2:
            TB = _round_up(-(-TB // 2), 8)
    else:
        TB = _round_up(min(block_b, _round_up(B, 8)), 8)
    B_pad = _round_up(B, TB)

    # ---- VMEM budget & T tile ----
    fixed_bytes = (2 * TB * 2 * D * 4            # nm input (double buffered, f32)
                   + 2 * TB * _OUT_LANES * 4     # output slab (double buffered, f32)
                   + TB * D * 4 + 2 * TB * 4     # acc + m + l scratch
                   + 2 * D * itemsize)           # w5t (tiny)
    avail = max(_VMEM_BUDGET - fixed_bytes, 1 << 20)
    if block_t is None:
        # ~8 MiB per streamed `old` buffer (bigger blocks amortize per-step overhead),
        # leaving room for up to 3 buffers within the budget.
        per_buf = min(_OLD_BUF_TARGET, avail // 3)
        block_t = max(1, per_buf // (TB * D * itemsize))
    TT = int(min(T, block_t))
    T_pad = _round_up(T, TT)
    nt = T_pad // TT

    # streamed `old` spec; deepen pipelining to 3 buffers when the T stream is long
    # enough and the installed jax supports BlockSpec(pipeline_mode=...).
    n_buf = 2
    old_spec = pl.BlockSpec((TT, TB, D), lambda bi, ti: (ti, bi, 0))
    if nt >= 4 and hasattr(pl, "Buffered"):
        try:
            old_spec = pl.BlockSpec((TT, TB, D), lambda bi, ti: (ti, bi, 0),
                                    pipeline_mode=pl.Buffered(3))
            n_buf = 3
        except TypeError:
            pass  # older jax: fall back to default double-buffering

    vmem_est = n_buf * TT * TB * D * itemsize + fixed_bytes
    vmem_limit = int(min(max(vmem_est + (6 << 20), 24 << 20), 56 << 20))

    # ---- padding (padded rows are benign and sliced off at the end) ----
    old_p = old_tbd
    if (T_pad, B_pad) != (T, B):
        old_p = jnp.pad(old_tbd, ((0, T_pad - T), (0, B_pad - B), (0, 0)))
    new_p = new if B_pad == B else jnp.pad(new, ((0, B_pad - B), (0, 0)))

    # ---- tiny one-time parameter prep (outside the kernel) ----
    # fc5 weight as (D, 1), pre-cast to the streamed dtype (no per-step cast).
    w5t = jnp.asarray(w5, jnp.float32).reshape(D, 1).astype(old_tbd.dtype)
    # Hoist the bilinear projection new @ [M1 | M2] out of the kernel: it runs once,
    # and keeps the (D, 2D) weight out of VMEM so the budget goes to `old` blocks.
    mcat = jnp.concatenate([jnp.asarray(M1, jnp.float32),
                            jnp.asarray(M2, jnp.float32)], axis=1)         # (D, 2D)
    nm = jnp.dot(new_p.astype(jnp.float32), mcat)                          # (B_pad, 2D) f32
    b5_s = jnp.asarray(b5, jnp.float32).reshape(1)
    b1_s = jnp.asarray(b1, jnp.float32).reshape(1)
    b2_s = jnp.asarray(b2, jnp.float32).reshape(1)

    grid = (B_pad // TB, nt)

    out = pl.pallas_call(
        functools.partial(similarity_kernel, t_total=T),
        out_shape=jax.ShapeDtypeStruct((B_pad, _OUT_LANES), jnp.float32),
        grid=grid,
        in_specs=[
            old_spec,                                                # old, streamed over T
            pl.BlockSpec((TB, 2 * D), lambda bi, ti: (bi, 0)),       # new @ [M1 | M2]
            pl.BlockSpec((D, 1), lambda bi, ti: (0, 0)),             # w5^T
            pl.BlockSpec(memory_space=pltpu.MemorySpace.SMEM),       # b5
            pl.BlockSpec(memory_space=pltpu.MemorySpace.SMEM),       # b1
            pl.BlockSpec(memory_space=pltpu.MemorySpace.SMEM),       # b2
        ],
        out_specs=pl.BlockSpec((TB, _OUT_LANES), lambda bi, ti: (bi, 0)),
        scratch_shapes=[
            pltpu.VMEM((TB, 1), jnp.float32),   # running max (attention softmax)
            pltpu.VMEM((TB, 1), jnp.float32),   # running denom
            pltpu.VMEM((TB, D), jnp.float32),   # running weighted sum of `old`
        ],
        compiler_params=pltpu.CompilerParams(
            dimension_semantics=("parallel", "arbitrary"),
            vmem_limit_bytes=vmem_limit),
    )(old_p, nm, w5t, b5_s, b1_s, b2_s)

    return out[:B, :2]


def reference_forward(old_tbd, new, w5, b5, M1, M2, b1, b2):
    old = jnp.transpose(old_tbd, (1, 0, 2))                        # (B, T, D)
    attn = jnp.einsum('btd,od->bto', old, w5) + b5[0]              # (B, T, 1)
    attn = jax.nn.softmax(attn, axis=1)
    pooled = jnp.sum(old * attn, axis=1)                           # (B, D)
    sp = jnp.diag(new @ M1 @ pooled.T) + b1[0]
    sn = jnp.diag(new @ M2 @ pooled.T) + b2[0]
    return jax.nn.softmax(jnp.stack([sp, sn]).T, axis=1)


if __name__ == "__main__":
    # small shapes consistent with the module (input_size = D); chosen so the
    # explicit-tile run exercises a real (3, 2) grid with padded B and T, and the
    # auto run exercises the >=2-batch-tile megacore path.
    T, B, D = 12, 20, 32

    key = jax.random.PRNGKey(0)
    k_old, k_new, k_w5, k_b5, k_m1, k_m2 = jax.random.split(key, 6)

    old = jax.random.normal(k_old, (T, B, D), dtype=jnp.float32)
    new = jax.random.normal(k_new, (B, D), dtype=jnp.float32)

    # fc5: Linear(D, 1) — PyTorch-style uniform(-1/sqrt(D), 1/sqrt(D)) init
    bound = 1.0 / (D ** 0.5)
    w5 = jax.random.uniform(k_w5, (1, D), jnp.float32, -bound, bound)
    b5 = jax.random.uniform(k_b5, (1,), jnp.float32, -bound, bound)

    # M1, M2: torch.rand((D, D)); b1, b2 init to 0.0
    M1 = jax.random.uniform(k_m1, (D, D), jnp.float32)
    M2 = jax.random.uniform(k_m2, (D, D), jnp.float32)
    b1 = jnp.zeros((1,), jnp.float32)
    b2 = jnp.zeros((1,), jnp.float32)

    ref = reference_forward(old, new, w5, b5, M1, M2, b1, b2)

    # (1) explicit small tiles -> grid (3, 2): batch pipelining, multi-step
    #     online softmax over T, and the padded-T mask are all exercised.
    score_tiled = jax.block_until_ready(
        similarity_forward(old, new, w5, b5, M1, M2, b1, b2, block_b=8, block_t=8))
    # (2) default auto-chosen tiles: 2 batch tiles (megacore path), single T step.
    score_auto = jax.block_until_ready(
        similarity_forward(old, new, w5, b5, M1, M2, b1, b2))

    assert score_tiled.shape == (B, 2) and score_auto.shape == (B, 2)
    assert jnp.allclose(score_tiled, ref, atol=1e-5, rtol=1e-4), "tiled mismatch vs reference"
    assert jnp.allclose(score_auto, ref, atol=1e-5, rtol=1e-4), "auto mismatch vs reference"

    print("KERNEL_OK")
</pallas_src>

<mosaic_0001>
module attributes {stable_mosaic.version = 11 : i64} {
  func.func @similarity_kernel(%arg0: i32, %arg1: i32, %arg2: memref<8x8x32xf32, #tpu.memory_space<vmem>>, %arg3: memref<8x64xf32, #tpu.memory_space<vmem>>, %arg4: memref<32x1xf32, #tpu.memory_space<vmem>>, %arg5: memref<1xf32, #tpu.memory_space<smem>>, %arg6: memref<1xf32, #tpu.memory_space<smem>>, %arg7: memref<1xf32, #tpu.memory_space<smem>>, %arg8: memref<8x128xf32, #tpu.memory_space<vmem>>, %arg9: memref<8x1xf32, #tpu.memory_space<vmem>>, %arg10: memref<8x1xf32, #tpu.memory_space<vmem>>, %arg11: memref<8x32xf32, #tpu.memory_space<vmem>>) attributes {dimension_semantics = [#tpu.dimension_semantics<parallel>, #tpu.dimension_semantics<arbitrary>], iteration_bounds = array<i64: 3, 2>, scalar_prefetch = 0 : i64, scratch_operands = 3 : i64, tpu.core_type = #tpu.core_type<tc>, window_params = [{transform_indices = @transform_0, window_bounds = array<i64: 8, 8, 32>}, {transform_indices = @transform_1, window_bounds = array<i64: 8, 64>}, {pipeline_mode = #tpu.pipeline_mode<synchronous>, transform_indices = @transform_2, window_bounds = array<i64: 32, 1>}, {transform_indices = @transform_3, window_bounds = array<i64: 1>}, {transform_indices = @transform_4, window_bounds = array<i64: 1>}, {transform_indices = @transform_5, window_bounds = array<i64: 1>}, {transform_indices = @transform_6, window_bounds = array<i64: 8, 128>}]} {
    %c0_i32 = arith.constant 0 : i32
    %0 = arith.cmpi eq, %arg1, %c0_i32 : i32
    %1 = arith.extui %0 : i1 to i32
    %c0_i32_0 = arith.constant 0 : i32
    %2 = arith.cmpi ne, %1, %c0_i32_0 : i32
    scf.if %2 {
      %cst_23 = arith.constant -1.000000e+30 : f32
      %45 = vector.broadcast %cst_23 : f32 to vector<8x1xf32>
      %c0_24 = arith.constant 0 : index
      %c0_25 = arith.constant 0 : index
      %46 = vector.load %arg9[%c0_24, %c0_25] : memref<8x1xf32, #tpu.memory_space<vmem>>, vector<8x1xf32>
      tpu.vector_store %arg9[%c0_24, %c0_25], %45 {strides = array<i32>} : memref<8x1xf32, #tpu.memory_space<vmem>>, vector<8x1xf32>,
      %cst_26 = arith.constant 0.000000e+00 : f32
      %47 = vector.broadcast %cst_26 : f32 to vector<8x1xf32>
      %c0_27 = arith.constant 0 : index
      %c0_28 = arith.constant 0 : index
      %48 = vector.load %arg10[%c0_27, %c0_28] : memref<8x1xf32, #tpu.memory_space<vmem>>, vector<8x1xf32>
      tpu.vector_store %arg10[%c0_27, %c0_28], %47 {strides = array<i32>} : memref<8x1xf32, #tpu.memory_space<vmem>>, vector<8x1xf32>,
      %cst_29 = arith.constant 0.000000e+00 : f32
      %49 = vector.broadcast %cst_29 : f32 to vector<8x32xf32>
      %c0_30 = arith.constant 0 : index
      %c0_31 = arith.constant 0 : index
      %50 = vector.load %arg11[%c0_30, %c0_31] : memref<8x32xf32, #tpu.memory_space<vmem>>, vector<8x32xf32>
      tpu.vector_store %arg11[%c0_30, %c0_31], %49 {strides = array<i32>} : memref<8x32xf32, #tpu.memory_space<vmem>>, vector<8x32xf32>,
    } else {
    }
    %c0 = arith.constant 0 : index
    %c0_1 = arith.constant 0 : index
    %c0_2 = arith.constant 0 : index
    %3 = vector.load %arg2[%c0, %c0_1, %c0_2] : memref<8x8x32xf32, #tpu.memory_space<vmem>>, vector<8x8x32xf32>
    %c0_3 = arith.constant 0 : index
    %4 = memref.load %arg5[%c0_3] : memref<1xf32, #tpu.memory_space<smem>>
    %5 = vector.shape_cast %3 : vector<8x8x32xf32> to vector<64x32xf32>
    %c0_4 = arith.constant 0 : index
    %c0_5 = arith.constant 0 : index
    %6 = vector.load %arg4[%c0_4, %c0_5] : memref<32x1xf32, #tpu.memory_space<vmem>>, vector<32x1xf32>
    %cst = arith.constant dense<0.000000e+00> : vector<64x1xf32>
    %7 = tpu.matmul %5, %6, %cst {dimension_numbers = #tpu.dot_dimension_numbers<[1], [0], [0], [1], [0, 0, 1, 1], [], []>} : vector<64x32xf32>, vector<32x1xf32>, vector<64x1xf32> -> vector<64x1xf32>
    %8 = vector.shape_cast %7 : vector<64x1xf32> to vector<8x8x1xf32>
    %9 = vector.broadcast %4 : f32 to vector<8x8x1xf32>
    %10 = arith.addf %8, %9 : vector<8x8x1xf32>
    %c8_i32 = arith.constant 8 : i32
    %11 = arith.muli %arg1, %c8_i32 : i32
    %12 = tpu.iota {dimensions = array<i32: 0>} : vector<8x8x1xi32>
    %13 = vector.broadcast %11 : i32 to vector<8x8x1xi32>
    %14 = arith.addi %13, %12 : vector<8x8x1xi32>
    %c12_i32 = arith.constant 12 : i32
    %15 = vector.broadcast %c12_i32 : i32 to vector<8x8x1xi32>
    %16 = arith.cmpi slt, %14, %15 : vector<8x8x1xi32>
    %cst_6 = arith.constant -1.000000e+30 : f32
    %17 = vector.broadcast %cst_6 : f32 to vector<8x8x1xf32>
    %18 = arith.select %16, %10, %17 : vector<8x8x1xi1>, vector<8x8x1xf32>
    %c0_7 = arith.constant 0 : index
    %c0_8 = arith.constant 0 : index
    %19 = vector.load %arg9[%c0_7, %c0_8] : memref<8x1xf32, #tpu.memory_space<vmem>>, vector<8x1xf32>
    %cst_9 = arith.constant dense<0xFF800000> : vector<8x1xf32>
    %20 = vector.multi_reduction <maximumf>, %18, %cst_9 [0] : vector<8x8x1xf32> to vector<8x1xf32>
    %21 = arith.maximumf %19, %20 : vector<8x1xf32>
    %22 = arith.subf %19, %21 : vector<8x1xf32>
    %23 = math.exp %22 : vector<8x1xf32>
    %24 = vector.shape_cast %21 : vector<8x1xf32> to vector<1x8x1xf32>
    %25 = vector.broadcast %24 : vector<1x8x1xf32> to vector<8x8x1xf32>
    %26 = arith.subf %18, %25 : vector<8x8x1xf32>
    %27 = math.exp %26 : vector<8x8x1xf32>
    %c0_10 = arith.constant 0 : index
    %c0_11 = arith.constant 0 : index
    %28 = vector.load %arg10[%c0_10, %c0_11] : memref<8x1xf32, #tpu.memory_space<vmem>>, vector<8x1xf32>
    %29 = arith.mulf %23, %28 : vector<8x1xf32>
    %cst_12 = arith.constant dense<0.000000e+00> : vector<8x1xf32>
    %30 = vector.multi_reduction <add>, %27, %cst_12 [0] : vector<8x8x1xf32> to vector<8x1xf32>
    %31 = arith.addf %29, %30 : vector<8x1xf32>
    %c0_13 = arith.constant 0 : index
    %c0_14 = arith.constant 0 : index
    %32 = vector.load %arg10[%c0_13, %c0_14] : memref<8x1xf32, #tpu.memory_space<vmem>>, vector<8x1xf32>
    tpu.vector_store %arg10[%c0_13, %c0_14], %31 {strides = array<i32>} : memref<8x1xf32, #tpu.memory_space<vmem>>, vector<8x1xf32>,
    %33 = vector.broadcast %27 : vector<8x8x1xf32> to vector<8x8x32xf32>
    %34 = arith.mulf %33, %3 : vector<8x8x32xf32>
    %c0_15 = arith.constant 0 : index
    %c0_16 = arith.constant 0 : index
    %35 = vector.load %arg11[%c0_15, %c0_16] : memref<8x32xf32, #tpu.memory_space<vmem>>, vector<8x32xf32>
    %36 = vector.broadcast %23 : vector<8x1xf32> to vector<8x32xf32>
    %37 = arith.mulf %36, %35 : vector<8x32xf32>
    %cst_17 = arith.constant dense<0.000000e+00> : vector<8x32xf32>
    %38 = vector.multi_reduction <add>, %34, %cst_17 [0] : vector<8x8x32xf32> to vector<8x32xf32>
    %39 = arith.addf %37, %38 : vector<8x32xf32>
    %c0_18 = arith.constant 0 : index
    %c0_19 = arith.constant 0 : index
    %40 = vector.load %arg11[%c0_18, %c0_19] : memref<8x32xf32, #tpu.memory_space<vmem>>, vector<8x32xf32>
    tpu.vector_store %arg11[%c0_18, %c0_19], %39 {strides = array<i32>} : memref<8x32xf32, #tpu.memory_space<vmem>>, vector<8x32xf32>,
    %c0_20 = arith.constant 0 : index
    %c0_21 = arith.constant 0 : index
    %41 = vector.load %arg9[%c0_20, %c0_21] : memref<8x1xf32, #tpu.memory_space<vmem>>, vector<8x1xf32>
    tpu.vector_store %arg9[%c0_20, %c0_21], %21 {strides = array<i32>} : memref<8x1xf32, #tpu.memory_space<vmem>>, vector<8x1xf32>,
    %c1_i32 = arith.constant 1 : i32
    %42 = arith.cmpi eq, %arg1, %c1_i32 : i32
    %43 = arith.extui %42 : i1 to i32
    %c0_i32_22 = arith.constant 0 : i32
    %44 = arith.cmpi ne, %43, %c0_i32_22 : i32
    scf.if %44 {
      %c0_23 = arith.constant 0 : index
      %c0_24 = arith.constant 0 : index
      %45 = vector.load %arg11[%c0_23, %c0_24] : memref<8x32xf32, #tpu.memory_space<vmem>>, vector<8x32xf32>
      %c0_25 = arith.constant 0 : index
      %c0_26 = arith.constant 0 : index
      %46 = vector.load %arg10[%c0_25, %c0_26] : memref<8x1xf32, #tpu.memory_space<vmem>>, vector<8x1xf32>
      %47 = tpu.reciprocal %46 : vector<8x1xf32> -> vector<8x1xf32>
      %48 = vector.broadcast %47 : vector<8x1xf32> to vector<8x32xf32>
      %49 = arith.mulf %45, %48 : vector<8x32xf32>
      %c0_27 = arith.constant 0 : index
      %c0_28 = arith.constant 0 : index
      %50 = vector.load %arg3[%c0_27, %c0_28] : memref<8x64xf32, #tpu.memory_space<vmem>>, vector<8x64xf32>
      %51 = vector.extract_strided_slice %50 {offsets = [0, 0], sizes = [8, 32], strides = [1, 1]} : vector<8x64xf32> to vector<8x32xf32>
      %52 = arith.mulf %51, %49 : vector<8x32xf32>
      %cst_29 = arith.constant dense<0.000000e+00> : vector<8xf32>
      %53 = vector.multi_reduction <add>, %52, %cst_29 [1] : vector<8x32xf32> to vector<8xf32>
      %54 = vector.shape_cast %53 : vector<8xf32> to vector<8x1xf32>
      %c0_30 = arith.constant 0 : index
      %55 = memref.load %arg6[%c0_30] : memref<1xf32, #tpu.memory_space<smem>>
      %56 = vector.broadcast %55 : f32 to vector<8x1xf32>
      %57 = arith.addf %54, %56 : vector<8x1xf32>
      %58 = vector.extract_strided_slice %50 {offsets = [0, 32], sizes = [8, 32], strides = [1, 1]} : vector<8x64xf32> to vector<8x32xf32>
      %59 = arith.mulf %58, %49 : vector<8x32xf32>
      %cst_31 = arith.constant dense<0.000000e+00> : vector<8xf32>
      %60 = vector.multi_reduction <add>, %59, %cst_31 [1] : vector<8x32xf32> to vector<8xf32>
      %61 = vector.shape_cast %60 : vector<8xf32> to vector<8x1xf32>
      %c0_32 = arith.constant 0 : index
      %62 = memref.load %arg7[%c0_32] : memref<1xf32, #tpu.memory_space<smem>>
      %63 = vector.broadcast %62 : f32 to vector<8x1xf32>
      %64 = arith.addf %61, %63 : vector<8x1xf32>
      %65 = arith.maximumf %57, %64 : vector<8x1xf32>
      %66 = arith.subf %57, %65 : vector<8x1xf32>
      %67 = math.exp %66 : vector<8x1xf32>
      %68 = arith.subf %64, %65 : vector<8x1xf32>
      %69 = math.exp %68 : vector<8x1xf32>
      %70 = arith.addf %67, %69 : vector<8x1xf32>
      %71 = tpu.reciprocal %70 : vector<8x1xf32> -> vector<8x1xf32>
      %72 = arith.mulf %67, %71 : vector<8x1xf32>
      %73 = arith.mulf %69, %71 : vector<8x1xf32>
      %74 = tpu.iota {dimensions = array<i32: 1>} : vector<8x128xi32>
      %c0_i32_33 = arith.constant 0 : i32
      %75 = vector.broadcast %c0_i32_33 : i32 to vector<8x128xi32>
      %76 = arith.cmpi eq, %74, %75 : vector<8x128xi32>
      %c1_i32_34 = arith.constant 1 : i32
      %77 = vector.broadcast %c1_i32_34 : i32 to vector<8x128xi32>
      %78 = arith.cmpi eq, %74, %77 : vector<8x128xi32>
      %cst_35 = arith.constant 0.000000e+00 : f32
      %79 = vector.shape_cast %73 : vector<8x1xf32> to vector<8x1xf32>
      %80 = vector.broadcast %79 : vector<8x1xf32> to vector<8x128xf32>
      %81 = vector.broadcast %cst_35 : f32 to vector<8x128xf32>
      %82 = arith.select %78, %80, %81 : vector<8x128xi1>, vector<8x128xf32>
      %83 = vector.shape_cast %72 : vector<8x1xf32> to vector<8x1xf32>
      %84 = vector.broadcast %83 : vector<8x1xf32> to vector<8x128xf32>
      %85 = arith.select %76, %84, %82 : vector<8x128xi1>, vector<8x128xf32>
      %c0_36 = arith.constant 0 : index
      %c0_37 = arith.constant 0 : index
      %86 = vector.load %arg8[%c0_36, %c0_37] : memref<8x128xf32, #tpu.memory_space<vmem>>, vector<8x128xf32>
      tpu.vector_store %arg8[%c0_36, %c0_37], %85 {strides = array<i32>} : memref<8x128xf32, #tpu.memory_space<vmem>>, vector<8x128xf32>,
    } else {
    }
    return
  }
  func.func @transform_0(%arg0: i32, %arg1: i32) -> (i32, i32, i32) {
    %c0_i32 = arith.constant 0 : i32
    %c0_i32_0 = arith.constant 0 : i32
    return %arg1, %arg0, %c0_i32 : i32, i32, i32
  }
  func.func @transform_1(%arg0: i32, %arg1: i32) -> (i32, i32) {
    %c0_i32 = arith.constant 0 : i32
    %c0_i32_0 = arith.constant 0 : i32
    return %arg0, %c0_i32 : i32, i32
  }
  func.func @transform_2(%arg0: i32, %arg1: i32) -> (i32, i32) {
    %c0_i32 = arith.constant 0 : i32
    %c0_i32_0 = arith.constant 0 : i32
    %c0_i32_1 = arith.constant 0 : i32
    return %c0_i32, %c0_i32_0 : i32, i32
  }
  func.func @transform_3(%arg0: i32, %arg1: i32) -> i32 {
    %c0_i32 = arith.constant 0 : i32
    %c0_i32_0 = arith.constant 0 : i32
    return %c0_i32 : i32
  }
  func.func @transform_4(%arg0: i32, %arg1: i32) -> i32 {
    %c0_i32 = arith.constant 0 : i32
    %c0_i32_0 = arith.constant 0 : i32
    return %c0_i32 : i32
  }
  func.func @transform_5(%arg0: i32, %arg1: i32) -> i32 {
    %c0_i32 = arith.constant 0 : i32
    %c0_i32_0 = arith.constant 0 : i32
    return %c0_i32 : i32
  }
  func.func @transform_6(%arg0: i32, %arg1: i32) -> (i32, i32) {
    %c0_i32 = arith.constant 0 : i32
    %c0_i32_0 = arith.constant 0 : i32
    return %arg0, %c0_i32 : i32, i32
  }
}

</mosaic_0001>

<llo_original>
// kernel: tpu_custom_call.1
$region0: #{tpu_custom_call.1}
  #allocation0 [shape = 'u32[]', space=smem, size = 0x4, offset = 0x4, fixed_abs, tag = 'smem constant byte address 0x4 - core index']
  #allocation1 [shape = 'u32[144,128]{1,0:T(1,128)}', space=vmem, size = 0x12000, scoped, tag = 'internal scratch']
  #allocation2 [shape = 'f32[8,1]{1,0:T(8,128)}', space=vmem, size = 0x1000, scoped, tag = 'scratch operand']
  #allocation3 [shape = 'f32[8,1]{1,0:T(8,128)}', space=vmem, size = 0x1000, scoped, tag = 'scratch operand']
  #allocation4 [shape = 'f32[8,32]{1,0:T(8,128)}', space=vmem, size = 0x1000, scoped, tag = 'scratch operand']
  #allocation5 [shape = 'f32[1]{0:T(128)S(6)}', space=smem, size = 0x200, scoped, tag = 'scoped memory for tpu_custom_call.1']
  #allocation6 [shape = 'f32[1]{0:T(128)S(6)}', space=smem, size = 0x200, scoped, tag = 'scoped memory for tpu_custom_call.1']
  #allocation7 [shape = 'f32[1]{0:T(128)S(6)}', space=smem, size = 0x200, scoped, tag = 'scoped memory for tpu_custom_call.1']
  %s0 = inlined_call_operand.hbm [shape: f32[16,24,32], index: 0, kind: input, shape index: {}]
  %s1 = inlined_call_operand.vmem [shape: f32[24,64], index: 1, kind: input, shape index: {}]
  %s2 = inlined_call_operand.vmem [shape: f32[32,1], index: 2, kind: input, shape index: {}]
  %s3 = inlined_call_operand.<no memory space> [shape: f32[1], index: 3, kind: input, shape index: {}]
  %s4 = inlined_call_operand.<no memory space> [shape: f32[1], index: 4, kind: input, shape index: {}]
  %s5 = inlined_call_operand.<no memory space> [shape: f32[1], index: 5, kind: input, shape index: {}]
  %s6 = inlined_call_operand.hbm [shape: f32[24,128], index: 6, kind: output, shape index: {}]
  %s7 = sld [smem:[#allocation0]]
  $region69: #{tpu_custom_call.1} parent=0
    _
  %s9 = ssub.s32 1, %s7
  %s10 = scalar_select 0, %s9, %s7
  %11 = sst [smem:[#allocation5]] %s3
  %12 = sst [smem:[#allocation6]] %s4
  %13 = sst [smem:[#allocation7]] %s5
  $region1: #{tpu_custom_call.1} parent=0
    #allocation8 [shape = 'u8[65536]{0}', space=vmem, size = 0x10000, scoped, tag = 'input window, operand 0']
    #allocation9 [shape = 's32[2]{0}', space=sflag, size = 0x8, scoped, tag = 'scoped memory for tpu_custom_call.1']
    #allocation10 [shape = 's32[2]{0}', space=sflag, size = 0x8, scoped, tag = 'scoped memory for tpu_custom_call.1']
    #allocation11 [shape = 'u8[8192]{0}', space=vmem, size = 0x2000, scoped, tag = 'output window, operand 0']
    %14 = vsyncpa [#allocation9], 0
    %s15 = scalar_lea.sflag [#allocation9], 1
    %16 = vsyncpa %s15, 0
    %17 = vsyncpa [#allocation10], 0
    %s18 = scalar_lea.sflag [#allocation10], 1
    %19 = vsyncpa %s18, 0
    loop: start=0, step=1, limit=8
    $region2: #{tpu_custom_call.1} parent=1 // loop_pre_header
      _
    $region3: #{tpu_custom_call.1} parent=1 // loop_header
      %s21 = sphi 0, %s25
      %p22 = scmp.ge.s32.totalorder %s21, 8
      %s28 = sphi 0, %s40
      %s29 = sphi 0, %s36
      %s30 = sphi 0, %s28
      %s31 = sphi 0, %s29
      %s32 = sphi 0, %s30
      %s33 = sphi 0, %s31
      %s45 = sphi 0, %s47
      %s48 = sphi 0, %s45
      %s49 = sphi 0, %s48
      %s65 = sphi 0, %s49
      %s71 = sphi 0, %s73
      %s74 = sphi 0, %s71
      %s75 = sphi 0, %s74
      %s91 = sphi 0, %s75
      %s95 = sphi 0, %s95
      %s97 = sphi 0, %s95
      %s98 = sphi 0, %s97
      %s112 = sphi 0, %s98
      %s116 = sphi 0, %s116
      %s118 = sphi 0, %s116
      %s119 = sphi 0, %s118
      %s133 = sphi 0, %s119
      %s137 = sphi 0, %s137
      %s139 = sphi 0, %s137
      %s140 = sphi 0, %s139
      %s154 = sphi 0, %s140
      %s158 = sphi 0, %s158
      %s160 = sphi 0, %s158
      %s161 = sphi 0, %s160
      %s175 = sphi 0, %s161
      %s181 = sphi 0, %s183
      %s184 = sphi 0, %s181
      %s185 = sphi 0, %s184
      %s201 = sphi 0, %s185
    $region4: #{tpu_custom_call.1} parent=1 // loop_header_branch
      %24 = sbr.rel (%p22) target = $region8
    $region5: #{tpu_custom_call.1} parent=1 // loop_body
      %s26 = ssub.s32 %s21, 1
      %s27 = ssub.s32 %s21, 2
      %s34 = sadd.s32 1, %s29
      %p35 = scmp.ge.s32.totalorder %s34, 2
      %s36 = scalar_select %p35, 0, %s34
      %s37 = sadd.s32 1, %s28
      %s38 = scalar_select %p35, %s37, %s28
      %p39 = scmp.ge.s32.totalorder %s38, 3
      %s40 = scalar_select %p39, 0, %s38
      %s41 = ssub.s32 %s29, %s36
      %s42 = ssub.s32 %s28, %s40
      %s43 = sor.u32 %s41, %s42
      %p44 = scmp.eq.s32.totalorder %s43, 0
      %s46 = sadd.s32 %s45, 1
      %s47 = scalar_select %p44, %s45, %s46
      %p50 = pneg %p44
      %p51 = scmp.eq.s32.totalorder %s21, 5
      %p52 = por %p50, %p51
      %p53 = scmp.ne.s32.totalorder %s45, %s48
      %p54 = scmp.eq.s32.totalorder %s21, 0
      %p55 = por %p53, %p54
      %p56 = scmp.ne.s32.totalorder %s45, %s48
      %p57 = scmp.eq.s32.totalorder %s26, 5
      %p58 = por %p56, %p57
      %p59 = scmp.ne.s32.totalorder %s48, %s49
      %p60 = scmp.eq.s32.totalorder %s26, 0
      %p61 = por %p59, %p60
      %p62 = scmp.ne.s32.totalorder %s48, %s49
      %p63 = scmp.eq.s32.totalorder %s27, 5
      %p64 = por %p62, %p63
      %p66 = scmp.ne.s32.totalorder %s49, %s65
      %p67 = scmp.eq.s32.totalorder %s27, 0
      %p68 = por %p66, %p67
      %s69 = ssub.s32 %s28, %s40
      %p70 = scmp.eq.s32.totalorder %s69, 0
      %s72 = sadd.s32 %s71, 1
      %s73 = scalar_select %p70, %s71, %s72
      %p76 = pneg %p70
      %p77 = scmp.eq.s32.totalorder %s21, 5
      %p78 = por %p76, %p77
      %p79 = scmp.ne.s32.totalorder %s71, %s74
      %p80 = scmp.eq.s32.totalorder %s21, 0
      %p81 = por %p79, %p80
      %p82 = scmp.ne.s32.totalorder %s71, %s74
      %p83 = scmp.eq.s32.totalorder %s26, 5
      %p84 = por %p82, %p83
      %p85 = scmp.ne.s32.totalorder %s74, %s75
      %p86 = scmp.eq.s32.totalorder %s26, 0
      %p87 = por %p85, %p86
      %p88 = scmp.ne.s32.totalorder %s74, %s75
      %p89 = scmp.eq.s32.totalorder %s27, 5
      %p90 = por %p88, %p89
      %p92 = scmp.ne.s32.totalorder %s75, %s91
      %p93 = scmp.eq.s32.totalorder %s27, 0
      %p94 = por %p92, %p93
      %s96 = sadd.s32 %s95, 1
      %p99 = scmp.eq.s32.totalorder %s21, 5
      %p100 = scmp.ne.s32.totalorder %s95, %s97
      %p101 = scmp.eq.s32.totalorder %s21, 0
      %p102 = por %p100, %p101
      %p103 = scmp.ne.s32.totalorder %s95, %s97
      %p104 = scmp.eq.s32.totalorder %s26, 5
      %p105 = por %p103, %p104
      %p106 = scmp.ne.s32.totalorder %s97, %s98
      %p107 = scmp.eq.s32.totalorder %s26, 0
      %p108 = por %p106, %p107
      %p109 = scmp.ne.s32.totalorder %s97, %s98
      %p110 = scmp.eq.s32.totalorder %s27, 5
      %p111 = por %p109, %p110
      %p113 = scmp.ne.s32.totalorder %s98, %s112
      %p114 = scmp.eq.s32.totalorder %s27, 0
      %p115 = por %p113, %p114
      %s117 = sadd.s32 %s116, 1
      %p120 = scmp.eq.s32.totalorder %s21, 5
      %p121 = scmp.ne.s32.totalorder %s116, %s118
      %p122 = scmp.eq.s32.totalorder %s21, 0
      %p123 = por %p121, %p122
      %p124 = scmp.ne.s32.totalorder %s116, %s118
      %p125 = scmp.eq.s32.totalorder %s26, 5
      %p126 = por %p124, %p125
      %p127 = scmp.ne.s32.totalorder %s118, %s119
      %p128 = scmp.eq.s32.totalorder %s26, 0
      %p129 = por %p127, %p128
      %p130 = scmp.ne.s32.totalorder %s118, %s119
      %p131 = scmp.eq.s32.totalorder %s27, 5
      %p132 = por %p130, %p131
      %p134 = scmp.ne.s32.totalorder %s119, %s133
      %p135 = scmp.eq.s32.totalorder %s27, 0
      %p136 = por %p134, %p135
      %s138 = sadd.s32 %s137, 1
      %p141 = scmp.eq.s32.totalorder %s21, 5
      %p142 = scmp.ne.s32.totalorder %s137, %s139
      %p143 = scmp.eq.s32.totalorder %s21, 0
      %p144 = por %p142, %p143
      %p145 = scmp.ne.s32.totalorder %s137, %s139
      %p146 = scmp.eq.s32.totalorder %s26, 5
      %p147 = por %p145, %p146
      %p148 = scmp.ne.s32.totalorder %s139, %s140
      %p149 = scmp.eq.s32.totalorder %s26, 0
      %p150 = por %p148, %p149
      %p151 = scmp.ne.s32.totalorder %s139, %s140
      %p152 = scmp.eq.s32.totalorder %s27, 5
      %p153 = por %p151, %p152
      %p155 = scmp.ne.s32.totalorder %s140, %s154
      %p156 = scmp.eq.s32.totalorder %s27, 0
      %p157 = por %p155, %p156
      %s159 = sadd.s32 %s158, 1
      %p162 = scmp.eq.s32.totalorder %s21, 5
      %p163 = scmp.ne.s32.totalorder %s158, %s160
      %p164 = scmp.eq.s32.totalorder %s21, 0
      %p165 = por %p163, %p164
      %p166 = scmp.ne.s32.totalorder %s158, %s160
      %p167 = scmp.eq.s32.totalorder %s26, 5
      %p168 = por %p166, %p167
      %p169 = scmp.ne.s32.totalorder %s160, %s161
      %p170 = scmp.eq.s32.totalorder %s26, 0
      %p171 = por %p169, %p170
      %p172 = scmp.ne.s32.totalorder %s160, %s161
      %p173 = scmp.eq.s32.totalorder %s27, 5
      %p174 = por %p172, %p173
      %p176 = scmp.ne.s32.totalorder %s161, %s175
      %p177 = scmp.eq.s32.totalorder %s27, 0
      %p178 = por %p176, %p177
      %s179 = ssub.s32 %s28, %s40
      %p180 = scmp.eq.s32.totalorder %s179, 0
      %s182 = sadd.s32 %s181, 1
      %s183 = scalar_select %p180, %s181, %s182
      %p186 = pneg %p180
      %p187 = scmp.eq.s32.totalorder %s21, 5
      %p188 = por %p186, %p187
      %p189 = scmp.ne.s32.totalorder %s181, %s184
      %p190 = scmp.eq.s32.totalorder %s21, 0
      %p191 = por %p189, %p190
      %p192 = scmp.ne.s32.totalorder %s181, %s184
      %p193 = scmp.eq.s32.totalorder %s26, 5
      %p194 = por %p192, %p193
      %p195 = scmp.ne.s32.totalorder %s184, %s185
      %p196 = scmp.eq.s32.totalorder %s26, 0
      %p197 = por %p195, %p196
      %p198 = scmp.ne.s32.totalorder %s184, %s185
      %p199 = scmp.eq.s32.totalorder %s27, 5
      %p200 = por %p198, %p199
      %p202 = scmp.ne.s32.totalorder %s185, %s201
      %p203 = scmp.eq.s32.totalorder %s27, 0
      %p204 = por %p202, %p203
      %p205 = scmp.le.s32.totalorder 1, %s21
      %p206 = scmp.lt.s32.totalorder %s21, 7
      %p207 = pnand %p205, %p206
      %p208 = pneg %p207
      // Predicated region
      $region9: #{tpu_custom_call.1} parent=5 // pred_check
        _
      $region10: #{tpu_custom_call.1} parent=5 // pred_check_branch
        %210 = sbr.rel (%p207) target = $region12
      $region11: #{tpu_custom_call.1} parent=5 // pred_region
        %s211 = ssub.s32 %s21, 1
        // Predicated region
        $region13: #{tpu_custom_call.1} parent=11 // pred_check
          %p212 = pneg %p108
        $region14: #{tpu_custom_call.1} parent=11 // pred_check_branch
          %214 = sbr.rel (%p212) target = $region16
        $region15: #{tpu_custom_call.1} parent=11 // pred_region
          _
        $region16: #{tpu_custom_call.1} parent=11 // pred_fallthru
          _
        // Predicated region
        $region17: #{tpu_custom_call.1} parent=11 // pred_check
          %p215 = pneg %p129
        $region18: #{tpu_custom_call.1} parent=11 // pred_check_branch
          %217 = sbr.rel (%p215) target = $region20
        $region19: #{tpu_custom_call.1} parent=11 // pred_region
          _
        $region20: #{tpu_custom_call.1} parent=11 // pred_fallthru
          _
        // Predicated region
        $region21: #{tpu_custom_call.1} parent=11 // pred_check
          %p218 = pneg %p150
        $region22: #{tpu_custom_call.1} parent=11 // pred_check_branch
          %220 = sbr.rel (%p218) target = $region24
        $region23: #{tpu_custom_call.1} parent=11 // pred_region
          _
        $region24: #{tpu_custom_call.1} parent=11 // pred_fallthru
          _
        // Predicated region
        $region25: #{tpu_custom_call.1} parent=11 // pred_check
          %p221 = pneg %p171
        $region26: #{tpu_custom_call.1} parent=11 // pred_check_branch
          %223 = sbr.rel (%p221) target = $region28
        $region27: #{tpu_custom_call.1} parent=11 // pred_region
          _
        $region28: #{tpu_custom_call.1} parent=11 // pred_fallthru
          _
      $region12: #{tpu_custom_call.1} parent=5 // pred_fallthru
        _
      %p224 = scmp.lt.s32.totalorder %s21, 6
      // Predicated region
      $region29: #{tpu_custom_call.1} parent=5 // pred_check
        %p225 = pneg %p224
      $region30: #{tpu_custom_call.1} parent=5 // pred_check_branch
        %227 = sbr.rel (%p225) target = $region32
      $region31: #{tpu_custom_call.1} parent=5 // pred_region
        // Predicated region
        $region33: #{tpu_custom_call.1} parent=31 // pred_check
          %p228 = pneg %p55
        $region34: #{tpu_custom_call.1} parent=31 // pred_check_branch
          %230 = sbr.rel (%p228) target = $region36
        $region35: #{tpu_custom_call.1} parent=31 // pred_region
          %s231 = sand.u32 %s45, 1
          %s232 = scalar_lea.sflag [#allocation9], %s231
          %s233 = sand.u32 %s45, 1
          %s234 = smul.addr %s233, 64
          %s235 = scalar_lea.vmem [#allocation8], %s234
          %s236 = smul.u32 8, %s29
          %s238 = ssub.s32 1024, 1024
          %239 = vsyncadd %s232, %s238
          %s240 = smul.addr %s236, 3
          %s241 = sadd.s32 %s28, %s240
          %s242 = smul.addr %s241, 128
          %s243 = scalar_lea.hbm %s0, %s242
          %s244 = sshll.u32 %s235, 4
          %s245 = int_to_ptr.vmem [resolvable:$true] %s244
          %250 = dma.hbm_to_vmem [thread:$0]  %s243, 1024, %s245, %s232, 384, 128, 8
        $region36: #{tpu_custom_call.1} parent=31 // pred_fallthru
          _
        // Predicated region
        $region37: #{tpu_custom_call.1} parent=31 // pred_check
          %p251 = pneg %p81
        $region38: #{tpu_custom_call.1} parent=31 // pred_check_branch
          %253 = sbr.rel (%p251) target = $region40
        $region39: #{tpu_custom_call.1} parent=31 // pred_region
          %p254 = scmp.lt.s32.totalorder %s28, 2
          %s255 = scalar_select %p254, %s28, 2
          %s256 = smul.addr %s255, 8
          %s257 = scalar_lea.vmem %s1, %s256
        $region40: #{tpu_custom_call.1} parent=31 // pred_fallthru
          _
      $region32: #{tpu_custom_call.1} parent=5 // pred_fallthru
        _
      %p258 = scmp.le.s32.totalorder 1, %s21
      %p259 = scmp.lt.s32.totalorder %s21, 7
      %p260 = pnand %p258, %p259
      %p261 = pneg %p260
      // Predicated region
      $region41: #{tpu_custom_call.1} parent=5 // pred_check
        _
      $region42: #{tpu_custom_call.1} parent=5 // pred_check_branch
        %263 = sbr.rel (%p260) target = $region44
      $region43: #{tpu_custom_call.1} parent=5 // pred_region
        %s264 = ssub.s32 %s21, 1
        %s265 = sand.u32 %s48, 1
        %s266 = scalar_lea.sflag [#allocation9], %s265
        %s267 = sand.u32 %s48, 1
        %s268 = smul.addr %s267, 64
        %s269 = scalar_lea.vmem [#allocation8], %s268
        // Predicated region
        $region45: #{tpu_custom_call.1} parent=43 // pred_check
          %p270 = pneg %p61
        $region46: #{tpu_custom_call.1} parent=43 // pred_check_branch
          %272 = sbr.rel (%p270) target = $region48
        $region47: #{tpu_custom_call.1} parent=43 // pred_region
          %273 = dma.done %s266, 1024
        $region48: #{tpu_custom_call.1} parent=43 // pred_fallthru
          _
        %s274 = sand.u32 %s48, 1
        %s275 = scalar_lea.sflag [#allocation9], %s274
        %s276 = sand.u32 %s48, 1
        %s277 = smul.addr %s276, 64
        %s278 = scalar_lea.vmem [#allocation8], %s277
        %p279 = pneg %p61
        %p280 = pneg %p58
        %p281 = scmp.lt.s32.totalorder %s30, 2
        %s282 = scalar_select %p281, %s30, 2
        %s283 = smul.addr %s282, 8
        %s284 = scalar_lea.vmem %s1, %s283
        %p285 = pneg %p87
        %p286 = pneg %p84
        %p287 = pneg %p108
        %p288 = pneg %p105
        %p289 = pneg %p129
        %p290 = pneg %p126
        %p291 = pneg %p150
        %p292 = pneg %p147
        %p293 = pneg %p171
        %p294 = pneg %p168
        %p295 = pneg %p197
        %p296 = pneg %p194
        %s297 = sand.u32 %s184, 1
        %s298 = scalar_lea.sflag [#allocation10], %s297
        %s299 = sand.u32 %s184, 1
        %s300 = smul.addr %s299, 8
        %s301 = scalar_lea.vmem [#allocation11], %s300
        %s302 = smul.u32 8, %s31
        %p303 = scmp.lt.s32.totalorder %s30, 2
        %s304 = scalar_select %p303, %s30, 2
        %s305 = smul.addr %s304, 8
        %s306 = scalar_lea.vmem %s1, %s305
        %p307 = scmp.eq.s32.totalorder %s31, 0
        // Predicated region
        $region49: #{tpu_custom_call.1} parent=43 // pred_check
          %p308 = pneg %p307
        $region50: #{tpu_custom_call.1} parent=43 // pred_check_branch
          %310 = sbr.rel (%p308) target = $region52
        $region51: #{tpu_custom_call.1} parent=43 // pred_region
          %vm311 = vcmask 7168
          %312 = vst.msk [vmem:[#allocation2] sm:$0xff] %vm311, -1e+30
          %313 = vst.msk [vmem:[#allocation3] sm:$0xff] %vm311, 0.0
          %vm314 = vcmask 261120
          %315 = vst.msk [vmem:[#allocation4] sm:$0xff] %vm314, 0.0
        $region52: #{tpu_custom_call.1} parent=43 // pred_fallthru
          _
        %v316 = vld [vmem:[%s269] sm:$0xff]
        %v317 = vld [vmem:[%s269 + $0x8] sm:$0xff]
        %v318 = vld [vmem:[%s269 + $0x10] sm:$0xff]
        %v319 = vld [vmem:[%s269 + $0x18] sm:$0xff]
        %v320 = vld [vmem:[%s269 + $0x20] sm:$0xff]
        %v321 = vld [vmem:[%s269 + $0x28] sm:$0xff]
        %v322 = vld [vmem:[%s269 + $0x30] sm:$0xff]
        %v323 = vld [vmem:[%s269 + $0x38] sm:$0xff]
        %s324 = sld [smem:[#allocation5]]
        %v325 = vld [vmem:[%s2] sm:$0xff]
        %v326 = vld [vmem:[%s2 + $0x8] sm:$0xff]
        %v327 = vld [vmem:[%s2 + $0x10] sm:$0xff]
        %v328 = vld [vmem:[%s2 + $0x18] sm:$0xff]
        %vm329 = vcmask 261120
        %v331 = vsel %vm329, %v316, 0
        %v334 = vsel %vm329, %v317, 0
        %v337 = vsel %vm329, %v318, 0
        %v340 = vsel %vm329, %v319, 0
        %v343 = vsel %vm329, %v320, 0
        %v346 = vsel %vm329, %v321, 0
        %v349 = vsel %vm329, %v322, 0
        %v352 = vsel %vm329, %v323, 0
        %354 = vmatprep.subr.mxu0 0.0
        %355 = vmatpush1.msra.mxu0 %v325
        %356 = vmatprep.subr.mxu0 0.0
        %357 = vmatpush1.msra.mxu0 %v326
        %358 = vmatprep.subr.mxu0 0.0
        %359 = vmatpush1.msra.mxu0 %v327
        %360 = vmatprep.subr.mxu0 0.0
        %361 = vmatpush1.msra.mxu0 %v328
        %362 = vmatprep.subr.mxu0 0.0
        %363 = vmatpush1.msra.mxu0 0.0
        %364 = vmatprep.subr.mxu0 0.0
        %365 = vmatpush1.msra.mxu0 0.0
        %366 = vmatprep.subr.mxu0 0.0
        %367 = vmatpush1.msra.mxu0 0.0
        %368 = vmatprep.subr.mxu0 0.0
        %369 = vmatpush1.msra.mxu0 0.0
        %370 = vmatprep.subr.mxu0 0.0
        %371 = vmatpush1.msra.mxu0 0.0
        %372 = vmatprep.subr.mxu0 0.0
        %373 = vmatpush1.msra.mxu0 0.0
        %374 = vmatprep.subr.mxu0 0.0
        %375 = vmatpush1.msra.mxu0 0.0
        %376 = vmatprep.subr.mxu0 0.0
        %377 = vmatpush1.msra.mxu0 0.0
        %378 = vmatprep.subr.mxu0 0.0
        %379 = vmatpush1.msra.mxu0 0.0
        %380 = vmatprep.subr.mxu0 0.0
        %381 = vmatpush1.msra.mxu0 0.0
        %382 = vmatprep.subr.mxu0 0.0
        %383 = vmatpush1.msra.mxu0 0.0
        %384 = vmatprep.subr.mxu0 0.0
        %385 = vmatpush1.msra.mxu0 0.0
        %386 = vmatprep.subr.mxu0 0.0
        %387 = vmatpush1.msra.mxu0 0.0
        %388 = vmatprep.subr.mxu0 0.0
        %389 = vmatpush1.msra.mxu0 0.0
        %390 = vmatprep.subr.mxu0 0.0
        %391 = vmatpush1.msra.mxu0 0.0
        %392 = vmatprep.subr.mxu0 0.0
        %393 = vmatpush1.msra.mxu0 0.0
        %394 = vmatprep.subr.mxu0 0.0
        %395 = vmatpush1.msra.mxu0 0.0
        %396 = vmatprep.subr.mxu0 0.0
        %397 = vmatpush1.msra.mxu0 0.0
        %398 = vmatprep.subr.mxu0 0.0
        %399 = vmatpush1.msra.mxu0 0.0
        %400 = vmatprep.subr.mxu0 0.0
        %401 = vmatpush1.msra.mxu0 0.0
        %402 = vmatprep.subr.mxu0 0.0
        %403 = vmatpush1.msra.mxu0 0.0
        %404 = vmatprep.subr.mxu0 0.0
        %405 = vmatpush1.msra.mxu0 0.0
        %406 = vmatprep.subr.mxu0 0.0
        %407 = vmatpush1.msra.mxu0 0.0
        %408 = vmatprep.subr.mxu0 0.0
        %409 = vmatpush1.msra.mxu0 0.0
        %410 = vmatprep.subr.mxu0 0.0
        %411 = vmatpush1.msra.mxu0 0.0
        %412 = vmatprep.subr.mxu0 0.0
        %413 = vmatpush1.msra.mxu0 0.0
        %414 = vmatprep.subr.mxu0 0.0
        %415 = vmatpush1.msra.mxu0 0.0
        %416 = vmatprep.subr.mxu0 0.0
        %417 = vmatpush1.msra.mxu0 0.0
        %418 = vmatprep.mubr.f32.mxu0 0.0
        %419 = vmatmul.mubr.f32.gmra.mrb[0].mxu0 %v331
        %v420 = vpop.f32.mrb[0].mxu0
        %v421 = vadd.f32 0.0, %v420
        %v422 = vpop.f32.mrb[0].mxu0
        %423 = vmatprep.mubr.f32.mxu0 0.0
        %424 = vmatmul.mubr.f32.gmra.mrb[0].mxu0 %v334
        %v425 = vpop.f32.mrb[0].mxu0
        %v426 = vadd.f32 0.0, %v425
        %v427 = vpop.f32.mrb[0].mxu0
        %428 = vmatprep.mubr.f32.mxu0 0.0
        %429 = vmatmul.mubr.f32.gmra.mrb[0].mxu0 %v337
        %v430 = vpop.f32.mrb[0].mxu0
        %v431 = vadd.f32 0.0, %v430
        %v432 = vpop.f32.mrb[0].mxu0
        %433 = vmatprep.mubr.f32.mxu0 0.0
        %434 = vmatmul.mubr.f32.gmra.mrb[0].mxu0 %v340
        %v435 = vpop.f32.mrb[0].mxu0
        %v436 = vadd.f32 0.0, %v435
        %v437 = vpop.f32.mrb[0].mxu0
        %438 = vmatprep.mubr.f32.mxu0 0.0
        %439 = vmatmul.mubr.f32.gmra.mrb[0].mxu0 %v343
        %v440 = vpop.f32.mrb[0].mxu0
        %v441 = vadd.f32 0.0, %v440
        %v442 = vpop.f32.mrb[0].mxu0
        %443 = vmatprep.mubr.f32.mxu0 0.0
        %444 = vmatmul.mubr.f32.gmra.mrb[0].mxu0 %v346
        %v445 = vpop.f32.mrb[0].mxu0
        %v446 = vadd.f32 0.0, %v445
        %v447 = vpop.f32.mrb[0].mxu0
        %448 = vmatprep.mubr.f32.mxu0 0.0
        %449 = vmatmul.mubr.f32.gmra.mrb[0].mxu0 %v349
        %v450 = vpop.f32.mrb[0].mxu0
        %v451 = vadd.f32 0.0, %v450
        %v452 = vpop.f32.mrb[0].mxu0
        %453 = vmatprep.mubr.f32.mxu0 0.0
        %454 = vmatmul.mubr.f32.gmra.mrb[0].mxu0 %v352
        %v455 = vpop.f32.mrb[0].mxu0
        %v456 = vadd.f32 0.0, %v455
        %v457 = vpop.f32.mrb[0].mxu0
        %458 = vdwg.mxu0
        %v459 = vstv %s324
        %v460 = vadd.f32 %v421, %v459
        %v461 = vadd.f32 %v426, %v459
        %v462 = vadd.f32 %v431, %v459
        %v463 = vadd.f32 %v436, %v459
        %v464 = vadd.f32 %v441, %v459
        %v465 = vadd.f32 %v446, %v459
        %v466 = vadd.f32 %v451, %v459
        %v467 = vadd.f32 %v456, %v459
        %s468 = smul.u32 %s31, 8
        %v469 = vstv %s468
        %v470 = vadd.s32 %v469, 1
        %v471 = vadd.s32 %v469, 2
        %v472 = vadd.s32 %v469, 3
        %v473 = vadd.s32 %v469, 4
        %v474 = vadd.s32 %v469, 5
        %v475 = vadd.s32 %v469, 6
        %v476 = vadd.s32 %v469, 7
        %vm477 = vcmp.lt.s32.totalorder %v469, 12
        %vm478 = vcmp.lt.s32.totalorder %v470, 12
        %vm479 = vcmp.lt.s32.totalorder %v471, 12
        %vm480 = vcmp.lt.s32.totalorder %v472, 12
        %vm481 = vcmp.lt.s32.totalorder %v473, 12
        %vm482 = vcmp.lt.s32.totalorder %v474, 12
        %vm483 = vcmp.lt.s32.totalorder %v475, 12
        %vm484 = vcmp.lt.s32.totalorder %v476, 12
        %v485 = vsel %vm477, %v460, -1e+30
        %v486 = vsel %vm478, %v461, -1e+30
        %v487 = vsel %vm479, %v462, -1e+30
        %v488 = vsel %vm480, %v463, -1e+30
        %v489 = vsel %vm481, %v464, -1e+30
        %v490 = vsel %vm482, %v465, -1e+30
        %v491 = vsel %vm483, %v466, -1e+30
        %v492 = vsel %vm484, %v467, -1e+30
        %v493 = vld [vmem:[#allocation2] sm:$0xff]
        %vm494 = vcmask 7168
        %v495 = vsel %vm494, %v485, -inf
        %v496 = vsel %vm494, %v486, -inf
        %v497 = vsel %vm494, %v487, -inf
        %v498 = vsel %vm494, %v488, -inf
        %v499 = vsel %vm494, %v489, -inf
        %v500 = vmax.f32 %v495, %v499
        %v501 = vsel %vm494, %v490, -inf
        %v502 = vmax.f32 %v496, %v501
        %v503 = vsel %vm494, %v491, -inf
        %v504 = vmax.f32 %v497, %v503
        %v505 = vsel %vm494, %v492, -inf
        %v506 = vmax.f32 %v498, %v505
        %v507 = vmax.f32 %v500, %v502
        %v508 = vmax.f32 %v504, %v506
        %v509 = vmax.f32 %v507, %v508
        %v510 = vmax.f32 %v493, %v509
        %v511 = vsub.f32 %v493, %v510
        %v512 = vmul.f32 %v511, 1.442695
        %v513 = vpow.pop %v512
        %v514 = vsub.f32 %v485, %v510
        %v515 = vsub.f32 %v486, %v510
        %v516 = vsub.f32 %v487, %v510
        %v517 = vsub.f32 %v488, %v510
        %v518 = vsub.f32 %v489, %v510
        %v519 = vsub.f32 %v490, %v510
        %v520 = vsub.f32 %v491, %v510
        %v521 = vsub.f32 %v492, %v510
        %v522 = vmul.f32 %v514, 1.442695
        %v523 = vpow.pop %v522
        %v524 = vmul.f32 %v515, 1.442695
        %v525 = vpow.pop %v524
        %v526 = vmul.f32 %v516, 1.442695
        %v527 = vpow.pop %v526
        %v528 = vmul.f32 %v517, 1.442695
        %v529 = vpow.pop %v528
        %v530 = vmul.f32 %v518, 1.442695
        %v531 = vpow.pop %v530
        %v532 = vmul.f32 %v519, 1.442695
        %v533 = vpow.pop %v532
        %v534 = vmul.f32 %v520, 1.442695
        %v535 = vpow.pop %v534
        %v536 = vmul.f32 %v521, 1.442695
        %v537 = vpow.pop %v536
        %v538 = vld [vmem:[#allocation3] sm:$0xff]
        %v539 = vmul.f32 %v513, %v538
        %v540 = vsel %vm494, %v523, 0.0
        %v541 = vsel %vm494, %v525, 0.0
        %v542 = vadd.f32 %v540, %v541
        %v543 = vsel %vm494, %v527, 0.0
        %v544 = vadd.f32 %v542, %v543
        %v545 = vsel %vm494, %v529, 0.0
        %v546 = vadd.f32 %v544, %v545
        %v547 = vsel %vm494, %v531, 0.0
        %v548 = vadd.f32 %v546, %v547
        %v549 = vsel %vm494, %v533, 0.0
        %v550 = vadd.f32 %v548, %v549
        %v551 = vsel %vm494, %v535, 0.0
        %v552 = vadd.f32 %v550, %v551
        %v553 = vsel %vm494, %v537, 0.0
        %v554 = vadd.f32 %v552, %v553
        %v555 = vadd.f32 %v539, %v554
        %556 = vst.msk [vmem:[#allocation3] sm:$0xff] %vm494, %v555
        %558 = vset.pattern.permute.xlu0 0
        %559 = vperm.xlu0 %558, %v523
        %v560 = vpop.permute.xlu0 %559
        %563 = vset.pattern.permute.xlu0 0
        %564 = vperm.xlu0 %563, %v525
        %v565 = vpop.permute.xlu0 %564
        %568 = vset.pattern.permute.xlu0 0
        %569 = vperm.xlu0 %568, %v527
        %v570 = vpop.permute.xlu0 %569
        %573 = vset.pattern.permute.xlu0 0
        %574 = vperm.xlu0 %573, %v529
        %v575 = vpop.permute.xlu0 %574
        %578 = vset.pattern.permute.xlu0 0
        %579 = vperm.xlu0 %578, %v531
        %v580 = vpop.permute.xlu0 %579
        %583 = vset.pattern.permute.xlu0 0
        %584 = vperm.xlu0 %583, %v533
        %v585 = vpop.permute.xlu0 %584
        %588 = vset.pattern.permute.xlu0 0
        %589 = vperm.xlu0 %588, %v535
        %v590 = vpop.permute.xlu0 %589
        %593 = vset.pattern.permute.xlu0 0
        %594 = vperm.xlu0 %593, %v537
        %v595 = vpop.permute.xlu0 %594
        %v597 = vmul.f32 %v560, %v316
        %v598 = vmul.f32 %v565, %v317
        %v599 = vmul.f32 %v570, %v318
        %v600 = vmul.f32 %v575, %v319
        %v601 = vmul.f32 %v580, %v320
        %v602 = vmul.f32 %v585, %v321
        %v603 = vmul.f32 %v590, %v322
        %v604 = vmul.f32 %v595, %v323
        %v605 = vld [vmem:[#allocation4] sm:$0xff]
        %607 = vset.pattern.permute.xlu0 0
        %608 = vperm.xlu0 %607, %v513
        %v609 = vpop.permute.xlu0 %608
        %v611 = vmul.f32 %v609, %v605
        %v612 = vsel %vm329, %v597, 0.0
        %v613 = vsel %vm329, %v598, 0.0
        %v614 = vadd.f32 %v612, %v613
        %v615 = vsel %vm329, %v599, 0.0
        %v616 = vadd.f32 %v614, %v615
        %v617 = vsel %vm329, %v600, 0.0
        %v618 = vadd.f32 %v616, %v617
        %v619 = vsel %vm329, %v601, 0.0
        %v620 = vadd.f32 %v618, %v619
        %v621 = vsel %vm329, %v602, 0.0
        %v622 = vadd.f32 %v620, %v621
        %v623 = vsel %vm329, %v603, 0.0
        %v624 = vadd.f32 %v622, %v623
        %v625 = vsel %vm329, %v604, 0.0
        %v626 = vadd.f32 %v624, %v625
        %v627 = vadd.f32 %v611, %v626
        %628 = vst.msk [vmem:[#allocation4] sm:$0xff] %vm329, %v627
        %629 = vst.msk [vmem:[#allocation2] sm:$0xff] %vm494, %v510
        %p630 = scmp.eq.s32.totalorder %s31, 1
        // Predicated region
        $region53: #{tpu_custom_call.1} parent=43 // pred_check
          %p631 = pneg %p630
        $region54: #{tpu_custom_call.1} parent=43 // pred_check_branch
          %633 = sbr.rel (%p631) target = $region56
        $region55: #{tpu_custom_call.1} parent=43 // pred_region
          %v634 = vld [vmem:[#allocation4] sm:$0xff]
          %v635 = vld [vmem:[#allocation3] sm:$0xff]
          %v636 = vrcp.pop %v635
          %638 = vset.pattern.permute.xlu0 0
          %639 = vperm.xlu0 %638, %v636
          %v640 = vpop.permute.xlu0 %639
          %v642 = vmul.f32 %v634, %v640
          %v643 = vld [vmem:[%s306] sm:$0xff]
          %v644 = vmul.f32 %v643, %v642
          %v645 = vsel %vm329, %v644, 0.0
          %646 = vadd.xlane.f32.xlu0 %v645
          %v647 = vpop.xlane.xlu0 %646
          %s648 = sld [smem:[#allocation6]]
          %v649 = vstv %s648
          %v650 = vadd.f32 %v647, %v649
          %652 = vrot.lane.b32.xlu0 %v642, 32
          %v653 = vpop.permute.xlu0 %652
          %v655 = vmul.f32 %v643, %v653
          %657 = vrot.lane.b32.xlu0 %v655, 96
          %v658 = vpop.permute.xlu0 %657
          %v660 = vsel %vm329, %v658, 0.0
          %661 = vadd.xlane.f32.xlu0 %v660
          %v662 = vpop.xlane.xlu0 %661
          %s663 = sld [smem:[#allocation7]]
          %v664 = vstv %s663
          %v665 = vadd.f32 %v662, %v664
          %v666 = vmax.f32 %v650, %v665
          %v667 = vsub.f32 %v650, %v666
          %v668 = vmul.f32 %v667, 1.442695
          %v669 = vpow.pop %v668
          %v670 = vsub.f32 %v665, %v666
          %v671 = vmul.f32 %v670, 1.442695
          %v672 = vpow.pop %v671
          %v673 = vadd.f32 %v669, %v672
          %v674 = vrcp.pop %v673
          %v675 = vmul.f32 %v669, %v674
          %v676 = vmul.f32 %v672, %v674
          %v677 = vlaneseq
          %v678 = vand.u32 %v677, 127
          %vm679 = vcmp.eq.s32.totalorder %v678, 0
          %vm680 = vcmp.eq.s32.totalorder %v678, 1
          %v681 = vsel %vm680, %v676, 0.0
          %v682 = vsel %vm679, %v675, %v681
          %683 = vst [vmem:[%s301] sm:$0xff] %v682
        $region56: #{tpu_custom_call.1} parent=43 // pred_fallthru
          _
        %s684 = sand.u32 %s184, 1
        %s685 = scalar_lea.sflag [#allocation10], %s684
        %s686 = sand.u32 %s184, 1
        %s687 = smul.addr %s686, 8
        %s688 = scalar_lea.vmem [#allocation11], %s687
        // Predicated region
        $region57: #{tpu_custom_call.1} parent=43 // pred_check
          %p689 = pneg %p194
        $region58: #{tpu_custom_call.1} parent=43 // pred_check_branch
          %691 = sbr.rel (%p689) target = $region60
        $region59: #{tpu_custom_call.1} parent=43 // pred_region
          %s693 = ssub.s32 128, 128
          %694 = vsyncadd %s685, %s693
          %s695 = smul.addr %s30, 128
          %s696 = scalar_lea.hbm %s6, %s695
          %s698 = sshll.u32 %s688, 4
          %s699 = int_to_ptr.vmem [resolvable:$true] %s698
          %701 = dma.vmem_to_hbm [thread:$0]  %s699, 128, %s696, %s685
        $region60: #{tpu_custom_call.1} parent=43 // pred_fallthru
          _
      $region44: #{tpu_custom_call.1} parent=5 // pred_fallthru
        _
      %p702 = scmp.le.s32.totalorder 2, %s21
      // Predicated region
      $region61: #{tpu_custom_call.1} parent=5 // pred_check
        %p703 = pneg %p702
      $region62: #{tpu_custom_call.1} parent=5 // pred_check_branch
        %705 = sbr.rel (%p703) target = $region64
      $region63: #{tpu_custom_call.1} parent=5 // pred_region
        %s706 = ssub.s32 %s21, 2
        // Predicated region
        $region65: #{tpu_custom_call.1} parent=63 // pred_check
          %p707 = pneg %p200
        $region66: #{tpu_custom_call.1} parent=63 // pred_check_branch
          %709 = sbr.rel (%p707) target = $region68
        $region67: #{tpu_custom_call.1} parent=63 // pred_region
          %s710 = sand.u32 %s185, 1
          %s711 = scalar_lea.sflag [#allocation10], %s710
          %s712 = sand.u32 %s185, 1
          %s713 = smul.addr %s712, 8
          %s714 = scalar_lea.vmem [#allocation11], %s713
          %715 = dma.done %s711, 128
        $region68: #{tpu_custom_call.1} parent=63 // pred_fallthru
          _
      $region64: #{tpu_custom_call.1} parent=5 // pred_fallthru
        _
    $region6: #{tpu_custom_call.1} parent=1 // loop_footer
      %s25 = sadd.s32 1, %s21
    $region7: #{tpu_custom_call.1} parent=1 // loop_footer_branch
      %20 = sbr.rel target = $region3
    $region8: #{tpu_custom_call.1} parent=1 // loop_exit
      _
    %716 = vsyncpa [#allocation9], 1
    %s717 = scalar_lea.sflag [#allocation9], 1
    %718 = vsyncpa %s717, 1
    %719 = vsyncpa [#allocation10], 1
    %s720 = scalar_lea.sflag [#allocation10], 1
    %721 = vsyncpa %s720, 1

</llo_original>
